<compile_context>
chip_gen: v5e
topology: v5e:2x2
jax: 0.10.0
libtpu: 0.0.40
codegen_flags: <defaults>
</compile_context>

<pallas_src>
import functools

import jax
import jax.numpy as jnp
import numpy as np
from jax.experimental import pallas as pl
from jax.experimental.pallas import tpu as pltpu

_VMEM_LIMIT = 32 * 1024 * 1024


# ----------------------------------------------------------------------------
# helpers
# ----------------------------------------------------------------------------
def _ceil_div(a, b):
    return -(-a // b)


def _round_up(a, b):
    return _ceil_div(a, b) * b


def _sublane(itemsize):
    return {1: 32, 2: 16}.get(int(itemsize), 8)


def _canonical(x):
    """Dtypes the kernels handle natively: float32, bfloat16, 32-bit ints."""
    dt = x.dtype
    if dt == jnp.float32 or dt == jnp.bfloat16:
        return x
    if jnp.issubdtype(dt, jnp.floating):
        return x.astype(jnp.float32)
    if jnp.issubdtype(dt, jnp.integer) and dt.itemsize >= 4:
        return x                      # keep integers exact (no float rounding)
    return x.astype(jnp.int32)        # small ints / bool


def _lowest(dtype):
    if jnp.issubdtype(dtype, jnp.floating):
        return float("-inf")
    return int(jnp.iinfo(dtype).min)


def _pick_small_n_tiles(sb_total, n, itemsize, budget_bytes):
    """Sublane-tile size for the (n, SB, 128) small-reduction layouts."""
    sub = _sublane(itemsize)
    if sb_total <= sub:
        return sb_total                                 # single full-extent block
    cap = max(sub, (budget_bytes // (n * 128 * itemsize)) // sub * sub)
    half = _round_up(_ceil_div(sb_total, 2), sub)       # >= 2 blocks for megacore
    return max(sub, min(cap, half, 4096))


# ----------------------------------------------------------------------------
# argmax, small reduction extent (N < 128): reduce over the leading axis.
# Block layout (N, SB, 128) -> fully dense vregs, lane-dense int32 output.
# ----------------------------------------------------------------------------
def _argmax_small_n_kernel(x_ref, o_ref):
    n = x_ref.shape[0]
    nan_aware = jnp.issubdtype(x_ref.dtype, jnp.floating)
    best_v = x_ref[0]                                   # (SB, 128)
    best_i = jnp.zeros(best_v.shape, jnp.int32)
    for k in range(1, n):                               # unrolled VPU chain
        v = x_ref[k]
        take = v > best_v                               # '>' => first occurrence
        if nan_aware:                                   # NaN counts as the max
            take = jnp.logical_or(take, (v != v) & (best_v == best_v))
        best_v = jnp.where(take, v, best_v)
        best_i = jnp.where(take, k, best_i)
    o_ref[...] = best_i


def _argmax_small_n(xt):
    """xt: (N, M) with N < 128.  Returns (M,) int32."""
    n, m = xt.shape
    sb_total = _ceil_div(m, 128)
    m_pad = sb_total * 128
    if m_pad != m:
        xt = jnp.pad(xt, ((0, 0), (0, m_pad - m)))      # columns independent
    x3 = xt.reshape(n, sb_total, 128)
    sb = _pick_small_n_tiles(sb_total, n, xt.dtype.itemsize, 6 << 20)
    grid_m = _ceil_div(sb_total, sb)                    # ragged last block is OK
    out = pl.pallas_call(
        _argmax_small_n_kernel,
        out_shape=jax.ShapeDtypeStruct((sb_total, 128), jnp.int32),
        grid_spec=pltpu.PrefetchScalarGridSpec(
            num_scalar_prefetch=0,
            grid=(grid_m,),
            in_specs=[pl.BlockSpec((n, sb, 128), lambda i: (0, i, 0))],
            out_specs=pl.BlockSpec((sb, 128), lambda i: (i, 0)),
        ),
        compiler_params=pltpu.CompilerParams(
            dimension_semantics=("parallel",),
            vmem_limit_bytes=_VMEM_LIMIT,
        ),
    )(x3)
    return out.reshape(-1)[:m]


# ----------------------------------------------------------------------------
# argmax, large reduction extent (N >= 128): lane-wide running accumulators
# over the last grid axis; cross-lane reduction only once at the end.
# ----------------------------------------------------------------------------
def _argmax_large_n_kernel(x_ref, *refs, with_val):
    if with_val:
        idx_ref, val_ref, max_sc, arg_sc = refs
    else:
        idx_ref, max_sc, arg_sc = refs
        val_ref = None
    j = pl.program_id(1)
    tm, tn = x_ref.shape
    nan_aware = jnp.issubdtype(x_ref.dtype, jnp.floating)

    @pl.when(j == 0)
    def _():
        if nan_aware:
            max_sc[...] = jnp.full(max_sc.shape, -jnp.inf, max_sc.dtype)
        else:
            max_sc[...] = jnp.full(max_sc.shape, jnp.iinfo(max_sc.dtype).min,
                                   max_sc.dtype)
        arg_sc[...] = jnp.zeros(arg_sc.shape, jnp.int32)

    lane = jax.lax.broadcasted_iota(jnp.int32, (tm, 128), 1)
    best_v = max_sc[...]
    best_i = arg_sc[...]
    base = j * tn
    for c in range(tn // 128):                           # unrolled VPU chain
        v = x_ref[:, c * 128:(c + 1) * 128]              # static slice, no copy
        take = v > best_v                                # '>' => first occurrence
        if nan_aware:
            take = jnp.logical_or(take, (v != v) & (best_v == best_v))
        best_v = jnp.where(take, v, best_v)
        best_i = jnp.where(take, base + c * 128 + lane, best_i)
    max_sc[...] = best_v
    arg_sc[...] = best_i

    @pl.when(j == pl.num_programs(1) - 1)
    def _():
        v = max_sc[...]
        i = arg_sc[...]
        row_max = jnp.max(v, axis=-1, keepdims=True)     # single XLU reduce
        is_max = v == row_max
        if nan_aware:
            is_max = jnp.logical_or(is_max, v != v)      # NaN lanes win
        big = jnp.iinfo(jnp.int32).max
        idx_ref[...] = jnp.min(jnp.where(is_max, i, big), axis=-1, keepdims=True)
        if with_val:
            val_ref[...] = row_max.astype(val_ref.dtype)


def _pick_large_n_tiles(m, n, itemsize):
    sub = _sublane(itemsize)
    n_pad = _round_up(n, 128)
    tn = min(2048, n_pad)
    while n_pad % tn:
        tn -= 128
    # double-buffered input blocks dominate VMEM; target <= ~8 MiB.
    cap = max(sub, ((8 << 20) // (2 * tn * itemsize)) // sub * sub)
    tm = max(sub, min(cap, _round_up(m, sub), 2048))
    if _ceil_div(m, tm) < 2 and m > 2 * sub:             # >= 2 M-blocks (megacore)
        tm = max(sub, _round_up(_ceil_div(m, 2), sub))
    return tm, tn, n_pad


def _argmax_large_n_call(x2, tm, tn, with_val):
    m, n_pad = x2.shape
    floating = jnp.issubdtype(x2.dtype, jnp.floating)
    out_shapes = [jax.ShapeDtypeStruct((m, 1), jnp.int32)]
    out_specs = [pl.BlockSpec((tm, 1), lambda i, j: (i, 0))]
    if with_val:
        val_dtype = jnp.float32 if floating else x2.dtype
        out_shapes.append(jax.ShapeDtypeStruct((m, 1), val_dtype))
        out_specs.append(pl.BlockSpec((tm, 1), lambda i, j: (i, 0)))
    return pl.pallas_call(
        functools.partial(_argmax_large_n_kernel, with_val=with_val),
        out_shape=tuple(out_shapes),
        grid_spec=pltpu.PrefetchScalarGridSpec(
            num_scalar_prefetch=0,
            grid=(_ceil_div(m, tm), n_pad // tn),
            in_specs=[pl.BlockSpec((tm, tn), lambda i, j: (i, j))],
            out_specs=tuple(out_specs),
            scratch_shapes=[pltpu.VMEM((tm, 128), x2.dtype),
                            pltpu.VMEM((tm, 128), jnp.int32)],
        ),
        compiler_params=pltpu.CompilerParams(
            dimension_semantics=("parallel", "arbitrary"),
            vmem_limit_bytes=_VMEM_LIMIT,
        ),
    )(x2)


def _argmax_large_n(x2):
    m, n = x2.shape
    tm, tn, n_pad = _pick_large_n_tiles(m, n, x2.dtype.itemsize)
    if n_pad != n:                                       # <=127 pad columns
        x2 = jnp.pad(x2, ((0, 0), (0, n_pad - n)),
                     constant_values=_lowest(x2.dtype))
    res = _argmax_large_n_call(x2, tm, tn, with_val=False)
    return res[0][:m, 0]


def _argmax_flat(x):
    flat = x.reshape(-1)
    total = flat.shape[0]
    # enough rows to fill sublanes and keep tiles big, few enough that the
    # wrapper-side combine stays trivial.
    r = min(256, max(8, (total // 2048) // 8 * 8))
    c = _round_up(_ceil_div(total, r), 128)
    fill = _lowest(flat.dtype)
    if r * c != total:
        flat = jnp.pad(flat, (0, r * c - total), constant_values=fill)
    x2 = flat.reshape(r, c)
    tm, tn, _ = _pick_large_n_tiles(r, c, x2.dtype.itemsize)
    idx, val = _argmax_large_n_call(x2, tm, tn, with_val=True)
    idx, val = idx[:r, 0], val[:r, 0]
    row = jnp.argmax(val)                   # first occurrence, NaN == max
    return (row.astype(jnp.int32) * c + idx[row]).astype(jnp.int32)


@functools.partial(jax.jit, static_argnames=("dim",))
def argmax(x, dim=None):
    """Pallas equivalent of torch.argmax(x, dim=dim) (int32 indices)."""
    if x.size >= 2 ** 31:
        raise ValueError("argmax: int32 index range exceeded; int64 needs x64.")
    x = _canonical(x)
    if dim is None:
        return _argmax_flat(x)
    dim = dim % x.ndim
    n = x.shape[dim]
    out_shape = x.shape[:dim] + x.shape[dim + 1:]
    if n == 1:
        return jnp.zeros(out_shape, jnp.int32)
    if n < 128:
        flat = _argmax_small_n(jnp.moveaxis(x, dim, 0).reshape(n, -1))
    else:
        flat = _argmax_large_n(jnp.moveaxis(x, dim, -1).reshape(-1, n))
    return flat.reshape(out_shape)


class ArgMax:
    """JAX/Pallas counterpart of the PyTorch ArgMax module."""

    def __init__(self, dim=None):
        self.dim = dim

    def __call__(self, x):
        return argmax(x, dim=self.dim)


# ----------------------------------------------------------------------------
# elementwise activations (sigmoid / tanh / relu / identity)
# ----------------------------------------------------------------------------
def _elementwise_kernel(x_ref, o_ref, *, op):
    x = x_ref[...]
    if op == "sigmoid":
        xf = x.astype(jnp.float32)
        # TODO(synk): pl.reciprocal(approx=True) is slightly faster (EUP slot)
        # but loses a few bits vs torch; kept exact (path is HBM-bound anyway).
        y = (1.0 / (1.0 + jnp.exp(-xf))).astype(x.dtype)
    elif op == "tanh":
        y = jnp.tanh(x.astype(jnp.float32)).astype(x.dtype)
    elif op == "relu":
        y = jnp.maximum(x, jnp.zeros((), x.dtype))
    else:
        y = x
    o_ref[...] = y


@functools.partial(jax.jit, static_argnames=("op",))
def elementwise(x, op):
    # TODO(synk): integer inputs to sigmoid/tanh are cast back to int here;
    # torch raises for integer tensors.
    shape, dtype = x.shape, x.dtype
    flat = x.reshape(-1)
    t = flat.shape[0]
    if t == 0:
        return x
    rows = _ceil_div(t, 128)
    if rows * 128 != t:                                 # <128-element tail pad
        flat = jnp.pad(flat, (0, rows * 128 - t))
    x2 = flat.reshape(rows, 128)
    sub = _sublane(dtype.itemsize)
    # ~1M elements per block (4 MiB f32 / 2 MiB bf16); HBM-roofline friendly.
    tr = max(sub, min(((1 << 20) // 128) // sub * sub, _round_up(rows, sub)))
    grid_r = _ceil_div(rows, tr)                        # ragged last block is OK
    if grid_r == 1 and rows > 2 * sub:                  # >= 2 blocks (megacore)
        tr = max(sub, _round_up(_ceil_div(rows, 2), sub))
        grid_r = _ceil_div(rows, tr)
    out = pl.pallas_call(
        functools.partial(_elementwise_kernel, op=op),
        out_shape=jax.ShapeDtypeStruct((rows, 128), dtype),
        grid_spec=pltpu.PrefetchScalarGridSpec(
            num_scalar_prefetch=0,
            grid=(grid_r,),
            in_specs=[pl.BlockSpec((tr, 128), lambda i: (i, 0))],
            out_specs=pl.BlockSpec((tr, 128), lambda i: (i, 0)),
        ),
        compiler_params=pltpu.CompilerParams(
            dimension_semantics=("parallel",),
            vmem_limit_bytes=_VMEM_LIMIT,
        ),
    )(x2)
    return out.reshape(-1)[:t].reshape(shape)


# ----------------------------------------------------------------------------
# softmax / logsoftmax
# ----------------------------------------------------------------------------
def _softmax_small_n_kernel(x_ref, o_ref, *, log):
    """Reduction over the small leading axis; (sb, 128) lane-dense tiles."""
    n = x_ref.shape[0]
    xs = [x_ref[0].astype(jnp.float32)]
    m = xs[0]
    for k in range(1, n):
        xk = x_ref[k].astype(jnp.float32)
        xs.append(xk)
        m = jnp.maximum(m, xk)
    if log:
        s = jnp.exp(xs[0] - m)
        for k in range(1, n):
            s = s + jnp.exp(xs[k] - m)
        ls = jnp.log(s)
        for k in range(n):
            o_ref[k] = ((xs[k] - m) - ls).astype(o_ref.dtype)
    else:
        es = [jnp.exp(xk - m) for xk in xs]
        s = es[0]
        for k in range(1, n):
            s = s + es[k]
        inv = 1.0 / s
        for k in range(n):
            o_ref[k] = (es[k] * inv).astype(o_ref.dtype)


def _softmax_small_n(x2, log):
    """x2: (n, M), n < 128.  Returns (n, M)."""
    n, m = x2.shape
    sb_total = _ceil_div(m, 128)
    m_pad = sb_total * 128
    if m_pad != m:
        x2 = jnp.pad(x2, ((0, 0), (0, m_pad - m)))      # columns independent
    x3 = x2.reshape(n, sb_total, 128)
    sb = _pick_small_n_tiles(sb_total, n, x2.dtype.itemsize, 2 << 20)
    grid_m = _ceil_div(sb_total, sb)
    out = pl.pallas_call(
        functools.partial(_softmax_small_n_kernel, log=log),
        out_shape=jax.ShapeDtypeStruct((n, sb_total, 128), x2.dtype),
        grid_spec=pltpu.PrefetchScalarGridSpec(
            num_scalar_prefetch=0,
            grid=(grid_m,),
            in_specs=[pl.BlockSpec((n, sb, 128), lambda i: (0, i, 0))],
            out_specs=pl.BlockSpec((n, sb, 128), lambda i: (0, i, 0)),
        ),
        compiler_params=pltpu.CompilerParams(
            dimension_semantics=("parallel",),
            vmem_limit_bytes=_VMEM_LIMIT,
        ),
    )(x3)
    return out.reshape(n, m_pad)[:, :m]


def _softmax_kernel(x_ref, o_ref, *, log):
    x = x_ref[...].astype(jnp.float32)
    m = jnp.max(x, axis=-1, keepdims=True)
    e = jnp.exp(x - m)
    s = jnp.sum(e, axis=-1, keepdims=True)
    if log:
        y = (x - m) - jnp.log(s)
    else:
        y = e / s
    o_ref[...] = y.astype(o_ref.dtype)


def _softmax_stats_kernel(x_ref, m_ref, s_ref, m_sc, s_sc):
    j = pl.program_id(1)

    @pl.when(j == 0)
    def _():
        m_sc[...] = jnp.full(m_sc.shape, -jnp.inf, jnp.float32)
        s_sc[...] = jnp.zeros(s_sc.shape, jnp.float32)

    x = x_ref[...].astype(jnp.float32)
    cm = jnp.max(x, axis=-1, keepdims=True)
    m_new = jnp.maximum(m_sc[...], cm)
    s_sc[...] = (s_sc[...] * jnp.exp(m_sc[...] - m_new)
                 + jnp.sum(jnp.exp(x - m_new), axis=-1, keepdims=True))
    m_sc[...] = m_new

    @pl.when(j == pl.num_programs(1) - 1)
    def _():
        m_ref[...] = m_sc[...]
        s_ref[...] = s_sc[...]


def _softmax_apply_kernel(x_ref, m_ref, s_ref, o_ref, *, log):
    x = x_ref[...].astype(jnp.float32)
    m = m_ref[...]
    s = s_ref[...]
    if log:
        y = (x - m) - jnp.log(s)
    else:
        y = jnp.exp(x - m) / s
    o_ref[...] = y.astype(o_ref.dtype)


def _softmax_two_pass(x2, log):
    """Tiled-n softmax for very long rows (keeps blocks small for v7x VMEM)."""
    m, n = x2.shape
    isz = x2.dtype.itemsize
    sub = _sublane(isz)
    n_pad = _round_up(n, 128)
    tn = min(2048, n_pad)
    while n_pad % tn:
        tn -= 128
    if n_pad != n:
        x2 = jnp.pad(x2, ((0, 0), (0, n_pad - n)), constant_values=-jnp.inf)
    cap = max(sub, ((6 << 20) // (2 * tn * isz)) // sub * sub)
    tm = max(sub, min(cap, _round_up(m, sub), 1024))
    grid = (_ceil_div(m, tm), n_pad // tn)
    mrow, srow = pl.pallas_call(
        _softmax_stats_kernel,
        out_shape=(jax.ShapeDtypeStruct((m, 1), jnp.float32),
                   jax.ShapeDtypeStruct((m, 1), jnp.float32)),
        grid_spec=pltpu.PrefetchScalarGridSpec(
            num_scalar_prefetch=0,
            grid=grid,
            in_specs=[pl.BlockSpec((tm, tn), lambda i, j: (i, j))],
            out_specs=(pl.BlockSpec((tm, 1), lambda i, j: (i, 0)),
                       pl.BlockSpec((tm, 1), lambda i, j: (i, 0))),
            scratch_shapes=[pltpu.VMEM((tm, 1), jnp.float32),
                            pltpu.VMEM((tm, 1), jnp.float32)],
        ),
        compiler_params=pltpu.CompilerParams(
            dimension_semantics=("parallel", "arbitrary"),
            vmem_limit_bytes=_VMEM_LIMIT,
        ),
    )(x2)
    out = pl.pallas_call(
        functools.partial(_softmax_apply_kernel, log=log),
        out_shape=jax.ShapeDtypeStruct((m, n_pad), x2.dtype),
        grid_spec=pltpu.PrefetchScalarGridSpec(
            num_scalar_prefetch=0,
            grid=grid,
            in_specs=[pl.BlockSpec((tm, tn), lambda i, j: (i, j)),
                      pl.BlockSpec((tm, 1), lambda i, j: (i, 0)),
                      pl.BlockSpec((tm, 1), lambda i, j: (i, 0))],
            out_specs=pl.BlockSpec((tm, tn), lambda i, j: (i, j)),
        ),
        compiler_params=pltpu.CompilerParams(
            dimension_semantics=("parallel", "parallel"),
            vmem_limit_bytes=_VMEM_LIMIT,
        ),
    )(x2, mrow, srow)
    return out[:, :n]


def _softmax_large_n(x2, log):
    """x2: (M, n), n >= 128.  Returns (M, n)."""
    m, n = x2.shape
    isz = x2.dtype.itemsize
    sub = _sublane(isz)
    # bytes per row in one block: in/out double-buffered + ~3 f32 temps.
    per_row = n * (4 * isz + 12)
    budget = 12 << 20
    if per_row * sub > budget:
        return _softmax_two_pass(x2, log)
    tm = max(sub, min((budget // per_row) // sub * sub,
                      _round_up(m, sub), 1024))
    grid_m = _ceil_div(m, tm)                           # ragged last block is OK
    if grid_m == 1 and m > 2 * sub:                     # >= 2 blocks (megacore)
        tm = max(sub, _round_up(_ceil_div(m, 2), sub))
        grid_m = _ceil_div(m, tm)
    return pl.pallas_call(
        functools.partial(_softmax_kernel, log=log),
        out_shape=jax.ShapeDtypeStruct((m, n), x2.dtype),
        grid_spec=pltpu.PrefetchScalarGridSpec(
            num_scalar_prefetch=0,
            grid=(grid_m,),
            in_specs=[pl.BlockSpec((tm, n), lambda i: (i, 0))],
            out_specs=pl.BlockSpec((tm, n), lambda i: (i, 0)),
        ),
        compiler_params=pltpu.CompilerParams(
            dimension_semantics=("parallel",),
            vmem_limit_bytes=_VMEM_LIMIT,
        ),
    )(x2)


@functools.partial(jax.jit, static_argnames=("dim", "log"))
def softmax(x, dim=-1, log=False):
    # TODO(synk): torch's nn.Softmax(dim=None) picks an implicit (deprecated)
    # dim; here the default is the last axis.
    dim = dim % x.ndim
    floating = jnp.issubdtype(x.dtype, jnp.floating)
    compute = x if (floating and x.dtype != jnp.float16) else x.astype(jnp.float32)
    n = compute.shape[dim]
    if n == 1:
        y = jnp.zeros_like(compute) if log else jnp.ones_like(compute)
    elif n < 128:
        moved = jnp.moveaxis(compute, dim, 0)
        y = _softmax_small_n(moved.reshape(n, -1), log).reshape(moved.shape)
        y = jnp.moveaxis(y, 0, dim)
    else:
        moved = jnp.moveaxis(compute, dim, -1)
        y = _softmax_large_n(moved.reshape(-1, n), log).reshape(moved.shape)
        y = jnp.moveaxis(y, -1, dim)
    # TODO(synk): integer inputs return float32 (torch raises for int tensors).
    return y.astype(x.dtype) if floating else y


# ----------------------------------------------------------------------------
# Activation module
# ----------------------------------------------------------------------------
class Activation:
    """JAX/Pallas counterpart of the PyTorch Activation module."""

    def __init__(self, name, **params):
        if name is None or name == "identity":
            self.activation = lambda x: x
        elif name == "sigmoid":
            self.activation = lambda x: elementwise(x, "sigmoid")
        elif name == "softmax2d":
            self.activation = lambda x: softmax(x, dim=1, **params)
        elif name == "softmax":
            self.activation = lambda x: softmax(x, **params)
        elif name == "logsoftmax":
            self.activation = lambda x: softmax(x, log=True, **params)
        elif name == "tanh":
            self.activation = lambda x: elementwise(x, "tanh")
        elif name == "argmax":
            self.activation = ArgMax(**params)
        elif name == "argmax2d":
            self.activation = ArgMax(dim=1, **params)
        elif name == "relu":
            self.activation = lambda x: elementwise(x, "relu")
        elif callable(name):
            self.activation = name(**params)
        else:
            raise ValueError(
                "Activation should be callable/sigmoid/softmax/logsoftmax/"
                "tanh/None; got {}".format(name))

    def __call__(self, x):
        return self.activation(x)


# ----------------------------------------------------------------------------
# tests
# ----------------------------------------------------------------------------
if __name__ == "__main__":
    k0, k1 = jax.random.split(jax.random.PRNGKey(0))
    x = jax.random.normal(k0, (2, 4, 16, 16), dtype=jnp.float32)   # NCHW

    # argmax2d: channel argmax (small-N sublane-reduction path)
    out = jax.block_until_ready(Activation("argmax2d")(x))
    ref = jnp.argmax(x, axis=1)
    assert out.shape == ref.shape, (out.shape, ref.shape)
    np.testing.assert_array_equal(np.asarray(out), np.asarray(ref))

    # bf16 channel argmax (native-dtype compares)
    xb = x.astype(jnp.bfloat16)
    outb = jax.block_until_ready(Activation("argmax2d")(xb))
    np.testing.assert_array_equal(np.asarray(outb),
                                  np.asarray(jnp.argmax(xb, axis=1)))

    # argmax over the flattened tensor (dim=None)
    out0 = jax.block_until_ready(Activation("argmax")(x))
    np.testing.assert_array_equal(np.asarray(out0), np.asarray(jnp.argmax(x)))

    # large reduction extent path (N >= 128), lane-wide accumulators
    xl = jax.random.normal(k1, (2, 8, 384), dtype=jnp.float32)
    outl = jax.block_until_ready(ArgMax(dim=-1)(xl))
    np.testing.assert_array_equal(np.asarray(outl),
                                  np.asarray(jnp.argmax(xl, axis=-1)))

    # elementwise activations
    for name, ref_fn in (("sigmoid", jax.nn.sigmoid),
                         ("tanh", jnp.tanh),
                         ("relu", jax.nn.relu),
                         ("identity", lambda a: a)):
        y = jax.block_until_ready(Activation(name)(x))
        np.testing.assert_allclose(np.asarray(y), np.asarray(ref_fn(x)),
                                   rtol=1e-5, atol=1e-5)

    # softmax family: small-N (channel) path
    y = jax.block_until_ready(Activation("softmax2d")(x))
    np.testing.assert_allclose(np.asarray(y),
                               np.asarray(jax.nn.softmax(x, axis=1)),
                               rtol=1e-5, atol=1e-6)
    y = jax.block_until_ready(Activation("logsoftmax", dim=1)(x))
    np.testing.assert_allclose(np.asarray(y),
                               np.asarray(jax.nn.log_softmax(x, axis=1)),
                               rtol=1e-5, atol=1e-5)

    # softmax: large-N (full-row) path
    y = jax.block_until_ready(Activation("softmax", dim=-1)(xl))
    np.testing.assert_allclose(np.asarray(y),
                               np.asarray(jax.nn.softmax(xl, axis=-1)),
                               rtol=1e-5, atol=1e-6)

    print("KERNEL_OK")
</pallas_src>

<mosaic_0001>
module attributes {stable_mosaic.version = 11 : i64} {
  func.func @_argmax_small_n_kernel(%arg0: i32, %arg1: memref<4x4x128xf32, #tpu.memory_space<vmem>>, %arg2: memref<4x128xi32, #tpu.memory_space<vmem>>) attributes {dimension_semantics = [#tpu.dimension_semantics<parallel>], iteration_bounds = array<i64: 1>, scalar_prefetch = 0 : i64, scratch_operands = 0 : i64, tpu.core_type = #tpu.core_type<tc>, window_params = [{transform_indices = @transform_0, window_bounds = array<i64: 4, 4, 128>}, {transform_indices = @transform_1, window_bounds = array<i64: 4, 128>}]} {
    %c0 = arith.constant 0 : index
    %c0_0 = arith.constant 0 : index
    %c0_1 = arith.constant 0 : index
    %0 = vector.load %arg1[%c0, %c0_0, %c0_1] : memref<4x4x128xf32, #tpu.memory_space<vmem>>, vector<1x4x128xf32>
    %1 = vector.shape_cast %0 : vector<1x4x128xf32> to vector<4x128xf32>
    %c0_i32 = arith.constant 0 : i32
    %2 = vector.broadcast %c0_i32 : i32 to vector<4x128xi32>
    %c1 = arith.constant 1 : index
    %c0_2 = arith.constant 0 : index
    %c0_3 = arith.constant 0 : index
    %3 = vector.load %arg1[%c1, %c0_2, %c0_3] : memref<4x4x128xf32, #tpu.memory_space<vmem>>, vector<1x4x128xf32>
    %4 = vector.shape_cast %3 : vector<1x4x128xf32> to vector<4x128xf32>
    %5 = arith.cmpf ogt, %4, %1 : vector<4x128xf32>
    %6 = arith.cmpf one, %4, %4 : vector<4x128xf32>
    %7 = arith.cmpf oeq, %1, %1 : vector<4x128xf32>
    %8 = arith.andi %6, %7 : vector<4x128xi1>
    %9 = arith.ori %5, %8 : vector<4x128xi1>
    %10 = arith.select %9, %4, %1 : vector<4x128xi1>, vector<4x128xf32>
    %c1_i32 = arith.constant 1 : i32
    %11 = vector.broadcast %c1_i32 : i32 to vector<4x128xi32>
    %12 = arith.select %9, %11, %2 : vector<4x128xi1>, vector<4x128xi32>
    %c2 = arith.constant 2 : index
    %c0_4 = arith.constant 0 : index
    %c0_5 = arith.constant 0 : index
    %13 = vector.load %arg1[%c2, %c0_4, %c0_5] : memref<4x4x128xf32, #tpu.memory_space<vmem>>, vector<1x4x128xf32>
    %14 = vector.shape_cast %13 : vector<1x4x128xf32> to vector<4x128xf32>
    %15 = arith.cmpf ogt, %14, %10 : vector<4x128xf32>
    %16 = arith.cmpf one, %14, %14 : vector<4x128xf32>
    %17 = arith.cmpf oeq, %10, %10 : vector<4x128xf32>
    %18 = arith.andi %16, %17 : vector<4x128xi1>
    %19 = arith.ori %15, %18 : vector<4x128xi1>
    %20 = arith.select %19, %14, %10 : vector<4x128xi1>, vector<4x128xf32>
    %c2_i32 = arith.constant 2 : i32
    %21 = vector.broadcast %c2_i32 : i32 to vector<4x128xi32>
    %22 = arith.select %19, %21, %12 : vector<4x128xi1>, vector<4x128xi32>
    %c3 = arith.constant 3 : index
    %c0_6 = arith.constant 0 : index
    %c0_7 = arith.constant 0 : index
    %23 = vector.load %arg1[%c3, %c0_6, %c0_7] : memref<4x4x128xf32, #tpu.memory_space<vmem>>, vector<1x4x128xf32>
    %24 = vector.shape_cast %23 : vector<1x4x128xf32> to vector<4x128xf32>
    %25 = arith.cmpf ogt, %24, %20 : vector<4x128xf32>
    %26 = arith.cmpf one, %24, %24 : vector<4x128xf32>
    %27 = arith.cmpf oeq, %20, %20 : vector<4x128xf32>
    %28 = arith.andi %26, %27 : vector<4x128xi1>
    %29 = arith.ori %25, %28 : vector<4x128xi1>
    %c3_i32 = arith.constant 3 : i32
    %30 = vector.broadcast %c3_i32 : i32 to vector<4x128xi32>
    %31 = arith.select %29, %30, %22 : vector<4x128xi1>, vector<4x128xi32>
    %c0_8 = arith.constant 0 : index
    %c0_9 = arith.constant 0 : index
    %32 = vector.load %arg2[%c0_8, %c0_9] : memref<4x128xi32, #tpu.memory_space<vmem>>, vector<4x128xi32>
    tpu.vector_store %arg2[%c0_8, %c0_9], %31 {strides = array<i32>} : memref<4x128xi32, #tpu.memory_space<vmem>>, vector<4x128xi32>,
    return
  }
  func.func @transform_0(%arg0: i32) -> (i32, i32, i32) {
    %c0_i32 = arith.constant 0 : i32
    %c0_i32_0 = arith.constant 0 : i32
    %c0_i32_1 = arith.constant 0 : i32
    return %c0_i32, %arg0, %c0_i32_0 : i32, i32, i32
  }
  func.func @transform_1(%arg0: i32) -> (i32, i32) {
    %c0_i32 = arith.constant 0 : i32
    %c0_i32_0 = arith.constant 0 : i32
    return %arg0, %c0_i32 : i32, i32
  }
}

</mosaic_0001>

<llo_original>
// kernel: argmax.1
$region0: #{argmax.1}
  #allocation0 [shape = 'u32[]', space=smem, size = 0x4, offset = 0x4, fixed_abs, tag = 'smem constant byte address 0x4 - core index']
  #allocation1 [shape = 'u32[72,128]{1,0:T(1,128)}', space=vmem, size = 0x9000, scoped, tag = 'internal scratch']
  %s0 = inlined_call_operand.vmem [shape: f32[4,4,128], index: 0, kind: input, shape index: {}]
  %s1 = inlined_call_operand.vmem [shape: s32[4,128], index: 1, kind: output, shape index: {}]
  %s2 = sld [smem:[#allocation0]]
  $region14: #{argmax.1} parent=0
    _
  %s4 = ssub.s32 1, %s2
  %s5 = scalar_select 0, %s4, %s2
  // Predicated region
  $region2: #{argmax.1} parent=0 // pred_check
    _
  $region3: #{argmax.1} parent=0 // pred_check_branch
    %7 = sbr.rel (0) target = $region5
  $region4: #{argmax.1} parent=0 // pred_region
    _
  $region5: #{argmax.1} parent=0 // pred_fallthru
    _
  %v8 = vld [vmem:[%s0] sm:$0xf]
  %s9 = scalar_lea.vmem %s0, 4
  %v10 = vld [vmem:[%s9] sm:$0xf]
  %vm11 = vcmp.gt.f32.partialorder %v10, %v8
  %vm12 = vcmp.ne.f32.partialorder %v10, %v10
  %vm13 = vcmp.eq.f32.partialorder %v8, %v8
  %vm14 = vmand %vm12, %vm13
  %vm15 = vmor %vm11, %vm14
  %v16 = vsel %vm15, %v10, %v8
  %v17 = vsel %vm15, 1, 0
  %s18 = scalar_lea.vmem %s0, 8
  %v19 = vld [vmem:[%s18] sm:$0xf]
  %vm20 = vcmp.gt.f32.partialorder %v19, %v16
  %vm21 = vcmp.ne.f32.partialorder %v19, %v19
  %vm22 = vcmp.eq.f32.partialorder %v16, %v16
  %vm23 = vmand %vm21, %vm22
  %vm24 = vmor %vm20, %vm23
  %v25 = vsel %vm24, %v19, %v16
  %v26 = vsel %vm24, 2, %v17
  %s27 = scalar_lea.vmem %s0, 12
  %v28 = vld [vmem:[%s27] sm:$0xf]
  %vm29 = vcmp.gt.f32.partialorder %v28, %v25
  %vm30 = vcmp.ne.f32.partialorder %v28, %v28
  %vm31 = vcmp.eq.f32.partialorder %v25, %v25
  %vm32 = vmand %vm30, %vm31
  %vm33 = vmor %vm29, %vm32
  %v34 = vsel %vm33, 3, %v26
  %35 = vst [vmem:[%s1] sm:$0xf] %v34
  // Predicated region
  $region6: #{argmax.1} parent=0 // pred_check
    _
  $region7: #{argmax.1} parent=0 // pred_check_branch
    %37 = sbr.rel (0) target = $region9
  $region8: #{argmax.1} parent=0 // pred_region
    _
  $region9: #{argmax.1} parent=0 // pred_fallthru
    _
  // Predicated region
  $region10: #{argmax.1} parent=0 // pred_check
    _
  $region11: #{argmax.1} parent=0 // pred_check_branch
    %39 = sbr.rel (0) target = $region13
  $region12: #{argmax.1} parent=0 // pred_region
    _
  $region13: #{argmax.1} parent=0 // pred_fallthru
    _

</llo_original>
